<compile_context>
chip_gen: v5e
topology: v5e:2x2
jax: 0.10.0
libtpu: 0.0.40
codegen_flags: <defaults>
</compile_context>

<pallas_src>
import functools
import math

import jax
import jax.numpy as jnp
from jax.experimental import pallas as pl
from jax.experimental.pallas import tpu as pltpu

N_QUBITS = 2
N_LAYERS = 3
LANES = 128
SUBLANES = 8


# ----------------------------- Pallas kernel ------------------------------- #
def quantum_kernel(c_ref, x_ref, o_ref):
    """c_ref: (9,) f32 SMEM (scalar prefetch); x_ref: (2, br, 128); o: (br, 128).

    Each lane holds one batch sample.
      <Z0> = c0 + c1*sin(x1) + c2*cos(x1)
           + c3*sin(x0) + c4*sin(x0)sin(x1) + c5*sin(x0)cos(x1)
           + c6*cos(x0) + c7*cos(x0)sin(x1) + c8*cos(x0)cos(x1)
    (signs of the -sin Bloch components already folded into the c_i).
    """
    x0 = x_ref[0]
    x1 = x_ref[1]
    s0, c0 = jnp.sin(x0), jnp.cos(x0)        # EUP slot (free wrt VALU)
    s1, c1 = jnp.sin(x1), jnp.cos(x1)

    acc = c_ref[0] + c_ref[1] * s1 + c_ref[2] * c1
    acc = acc + c_ref[3] * s0 + c_ref[4] * (s0 * s1) + c_ref[5] * (s0 * c1)
    acc = acc + c_ref[6] * c0 + c_ref[7] * (c0 * s1) + c_ref[8] * (c0 * c1)
    o_ref[...] = acc


# ------------------------- parameter / unitary glue ------------------------- #
_CNOT_01 = jnp.array(
    [[1, 0, 0, 0], [0, 1, 0, 0], [0, 0, 0, 1], [0, 0, 1, 0]], dtype=jnp.complex64
)  # control wire 0, target wire 1 (wire 0 = MSB)
_CNOT_10 = jnp.array(
    [[1, 0, 0, 0], [0, 0, 0, 1], [0, 0, 1, 0], [0, 1, 0, 0]], dtype=jnp.complex64
)  # control wire 1, target wire 0


def _rot(phi, theta, omega):
    """PennyLane Rot(phi, theta, omega) = RZ(omega) RY(theta) RZ(phi)."""
    c = jnp.cos(theta / 2.0)
    s = jnp.sin(theta / 2.0)
    m00 = jnp.exp(-1j * (phi + omega) / 2.0) * c
    m01 = -jnp.exp(1j * (phi - omega) / 2.0) * s
    m10 = jnp.exp(-1j * (phi - omega) / 2.0) * s
    m11 = jnp.exp(1j * (phi + omega) / 2.0) * c
    return jnp.stack(
        [jnp.stack([m00, m01]), jnp.stack([m10, m11])]
    ).astype(jnp.complex64)


def build_entangling_unitary(weights):
    """StronglyEntanglingLayers on 2 wires (ranges = 1 for every layer)."""
    u = jnp.eye(4, dtype=jnp.complex64)
    n_layers = weights.shape[0]
    for l in range(n_layers):
        r0 = _rot(weights[l, 0, 0], weights[l, 0, 1], weights[l, 0, 2])
        r1 = _rot(weights[l, 1, 0], weights[l, 1, 1], weights[l, 1, 2])
        layer = _CNOT_10 @ _CNOT_01 @ jnp.kron(r0, r1)
        u = layer @ u
    return u


def build_observable_coeffs(weights):
    """9 Bloch-product coefficients c_PQ, P,Q in {I, Y, Z}, -sin signs folded in."""
    u = build_entangling_unitary(weights)                        # (4, 4) complex64
    z0 = jnp.array([1.0, 1.0, -1.0, -1.0], dtype=jnp.complex64)  # PauliZ on wire 0
    obs = jnp.conj(u).T @ (z0[:, None] * u)                      # O = U^H Z0 U

    eye = jnp.eye(2, dtype=jnp.complex64)
    pauli_y = jnp.array([[0.0, -1.0j], [1.0j, 0.0]], dtype=jnp.complex64)
    pauli_z = jnp.array([[1.0, 0.0], [0.0, -1.0]], dtype=jnp.complex64)
    paulis = [eye, pauli_y, pauli_z]
    sign = [1.0, -1.0, 1.0]            # Tr[rho Y] = -sin(x); fold the minus here

    coeffs = []
    for j in range(3):
        for k in range(3):
            c = jnp.real(jnp.trace(obs @ jnp.kron(paulis[j], paulis[k]))) / 4.0
            coeffs.append(sign[j] * sign[k] * c)
    return jnp.stack(coeffs).astype(jnp.float32)


# ------------------------------ forward wrapper ------------------------------ #
@functools.partial(jax.jit, static_argnames=("block_rows",))
def quantum_layer_forward(x, weights, block_rows=1024):
    """Pallas-backed equivalent of QuantumLayer.forward: (B, 2) -> (B, 1)."""
    B = x.shape[0]
    c_flat = build_observable_coeffs(weights)

    # Lane-dense batch layout: samples along lanes, sublane-aligned row count.
    rows = pl.cdiv(B, LANES)
    rows = pl.cdiv(rows, SUBLANES) * SUBLANES
    br = max(SUBLANES, (min(block_rows, rows) // SUBLANES) * SUBLANES)
    grid = pl.cdiv(rows, br)            # ragged last block; no extra row padding
    padded = rows * LANES

    # Single fused pad + transpose -> one (2, rows, 128) slab (one DMA stream).
    xp = jnp.zeros((padded, N_QUBITS), jnp.float32).at[:B].set(x.astype(jnp.float32))
    x_planes = xp.T.reshape(N_QUBITS, rows, LANES)

    out = pl.pallas_call(
        quantum_kernel,
        out_shape=jax.ShapeDtypeStruct((rows, LANES), jnp.float32),
        grid_spec=pltpu.PrefetchScalarGridSpec(
            num_scalar_prefetch=1,                         # c_flat -> SMEM
            grid=(grid,),
            in_specs=[
                pl.BlockSpec((N_QUBITS, br, LANES), lambda i, c: (0, i, 0)),
            ],
            out_specs=pl.BlockSpec((br, LANES), lambda i, c: (i, 0)),
        ),
        compiler_params=pltpu.CompilerParams(
            # Batch axis is embarrassingly parallel; on v7x consider
            # pltpu.CORE_PARALLEL to force 2-TC sharding of the grid.
            dimension_semantics=("parallel",),
        ),
    )(c_flat, x_planes)

    return out.reshape(-1)[:B][:, None]


# ------------------------------ pure-JAX ref -------------------------------- #
def reference_forward(x, weights):
    u = build_entangling_unitary(weights)

    def rx(t):
        c = jnp.cos(t / 2.0)
        s = jnp.sin(t / 2.0)
        return jnp.stack(
            [jnp.stack([c, -1j * s]), jnp.stack([-1j * s, c])]
        ).astype(jnp.complex64)

    outs = []
    zsign = jnp.array([1.0, 1.0, -1.0, -1.0], dtype=jnp.float32)
    for i in range(x.shape[0]):
        psi0 = jnp.kron(rx(x[i, 0]), rx(x[i, 1]))[:, 0]
        psi = u @ psi0
        outs.append(jnp.sum((jnp.abs(psi) ** 2).astype(jnp.float32) * zsign))
    return jnp.stack(outs)[:, None]


# ---------------------------------- main ------------------------------------ #
if __name__ == "__main__":
    key = jax.random.PRNGKey(0)
    kx, kw = jax.random.split(key)

    batch = 8
    # inputs: batch of 2-dim angle vectors (what TorchLayer feeds the circuit)
    x = jax.random.uniform(
        kx, (batch, N_QUBITS), dtype=jnp.float32, minval=-math.pi, maxval=math.pi
    )
    # weights: TorchLayer default init for StronglyEntanglingLayers ~ U(0, 2*pi)
    weights = jax.random.uniform(
        kw, (N_LAYERS, N_QUBITS, 3), dtype=jnp.float32, minval=0.0, maxval=2.0 * math.pi
    )

    out = quantum_layer_forward(x, weights)
    out = jax.block_until_ready(out)

    ref = reference_forward(x, weights)
    assert out.shape == (batch, 1), out.shape
    assert jnp.allclose(out, ref, atol=3e-5, rtol=1e-5), (out, ref)

    print("KERNEL_OK")
</pallas_src>

<mosaic_0001>
module attributes {stable_mosaic.version = 11 : i64} {
  func.func @quantum_kernel(%arg0: i32, %arg1: memref<9xf32, #tpu.memory_space<smem>>, %arg2: memref<2x8x128xf32, #tpu.memory_space<vmem>>, %arg3: memref<8x128xf32, #tpu.memory_space<vmem>>) attributes {dimension_semantics = [#tpu.dimension_semantics<parallel>], iteration_bounds = array<i64: 1>, scalar_prefetch = 1 : i64, scratch_operands = 0 : i64, tpu.core_type = #tpu.core_type<tc>, window_params = [{transform_indices = @transform_0, window_bounds = array<i64: 2, 8, 128>}, {transform_indices = @transform_1, window_bounds = array<i64: 8, 128>}]} {
    %c0 = arith.constant 0 : index
    %c0_0 = arith.constant 0 : index
    %c0_1 = arith.constant 0 : index
    %0 = vector.load %arg2[%c0, %c0_0, %c0_1] : memref<2x8x128xf32, #tpu.memory_space<vmem>>, vector<1x8x128xf32>
    %1 = vector.shape_cast %0 : vector<1x8x128xf32> to vector<8x128xf32>
    %c1 = arith.constant 1 : index
    %c0_2 = arith.constant 0 : index
    %c0_3 = arith.constant 0 : index
    %2 = vector.load %arg2[%c1, %c0_2, %c0_3] : memref<2x8x128xf32, #tpu.memory_space<vmem>>, vector<1x8x128xf32>
    %3 = vector.shape_cast %2 : vector<1x8x128xf32> to vector<8x128xf32>
    %4 = math.sin %1 : vector<8x128xf32>
    %5 = math.cos %1 : vector<8x128xf32>
    %6 = math.sin %3 : vector<8x128xf32>
    %7 = math.cos %3 : vector<8x128xf32>
    %c0_4 = arith.constant 0 : index
    %8 = memref.load %arg1[%c0_4] : memref<9xf32, #tpu.memory_space<smem>>
    %c1_5 = arith.constant 1 : index
    %9 = memref.load %arg1[%c1_5] : memref<9xf32, #tpu.memory_space<smem>>
    %10 = vector.broadcast %9 : f32 to vector<8x128xf32>
    %11 = arith.mulf %10, %6 : vector<8x128xf32>
    %12 = vector.broadcast %8 : f32 to vector<8x128xf32>
    %13 = arith.addf %12, %11 : vector<8x128xf32>
    %c2 = arith.constant 2 : index
    %14 = memref.load %arg1[%c2] : memref<9xf32, #tpu.memory_space<smem>>
    %15 = vector.broadcast %14 : f32 to vector<8x128xf32>
    %16 = arith.mulf %15, %7 : vector<8x128xf32>
    %17 = arith.addf %13, %16 : vector<8x128xf32>
    %c3 = arith.constant 3 : index
    %18 = memref.load %arg1[%c3] : memref<9xf32, #tpu.memory_space<smem>>
    %19 = vector.broadcast %18 : f32 to vector<8x128xf32>
    %20 = arith.mulf %19, %4 : vector<8x128xf32>
    %21 = arith.addf %17, %20 : vector<8x128xf32>
    %c4 = arith.constant 4 : index
    %22 = memref.load %arg1[%c4] : memref<9xf32, #tpu.memory_space<smem>>
    %23 = arith.mulf %4, %6 : vector<8x128xf32>
    %24 = vector.broadcast %22 : f32 to vector<8x128xf32>
    %25 = arith.mulf %24, %23 : vector<8x128xf32>
    %26 = arith.addf %21, %25 : vector<8x128xf32>
    %c5 = arith.constant 5 : index
    %27 = memref.load %arg1[%c5] : memref<9xf32, #tpu.memory_space<smem>>
    %28 = arith.mulf %4, %7 : vector<8x128xf32>
    %29 = vector.broadcast %27 : f32 to vector<8x128xf32>
    %30 = arith.mulf %29, %28 : vector<8x128xf32>
    %31 = arith.addf %26, %30 : vector<8x128xf32>
    %c6 = arith.constant 6 : index
    %32 = memref.load %arg1[%c6] : memref<9xf32, #tpu.memory_space<smem>>
    %33 = vector.broadcast %32 : f32 to vector<8x128xf32>
    %34 = arith.mulf %33, %5 : vector<8x128xf32>
    %35 = arith.addf %31, %34 : vector<8x128xf32>
    %c7 = arith.constant 7 : index
    %36 = memref.load %arg1[%c7] : memref<9xf32, #tpu.memory_space<smem>>
    %37 = arith.mulf %5, %6 : vector<8x128xf32>
    %38 = vector.broadcast %36 : f32 to vector<8x128xf32>
    %39 = arith.mulf %38, %37 : vector<8x128xf32>
    %40 = arith.addf %35, %39 : vector<8x128xf32>
    %c8 = arith.constant 8 : index
    %41 = memref.load %arg1[%c8] : memref<9xf32, #tpu.memory_space<smem>>
    %42 = arith.mulf %5, %7 : vector<8x128xf32>
    %43 = vector.broadcast %41 : f32 to vector<8x128xf32>
    %44 = arith.mulf %43, %42 : vector<8x128xf32>
    %45 = arith.addf %40, %44 : vector<8x128xf32>
    %c0_6 = arith.constant 0 : index
    %c0_7 = arith.constant 0 : index
    %46 = vector.load %arg3[%c0_6, %c0_7] : memref<8x128xf32, #tpu.memory_space<vmem>>, vector<8x128xf32>
    tpu.vector_store %arg3[%c0_6, %c0_7], %45 {strides = array<i32>} : memref<8x128xf32, #tpu.memory_space<vmem>>, vector<8x128xf32>,
    return
  }
  func.func @transform_0(%arg0: i32, %arg1: memref<9xf32, #tpu.memory_space<smem>>) -> (i32, i32, i32) {
    %c0_i32 = arith.constant 0 : i32
    %c0_i32_0 = arith.constant 0 : i32
    %c0_i32_1 = arith.constant 0 : i32
    return %c0_i32, %arg0, %c0_i32_0 : i32, i32, i32
  }
  func.func @transform_1(%arg0: i32, %arg1: memref<9xf32, #tpu.memory_space<smem>>) -> (i32, i32) {
    %c0_i32 = arith.constant 0 : i32
    %c0_i32_0 = arith.constant 0 : i32
    return %arg0, %c0_i32 : i32, i32
  }
}

</mosaic_0001>

<llo_original>
// kernel: quantum_layer_forward.1
$region0: #{quantum_layer_forward.1}
  #allocation0 [shape = 'u32[]', space=smem, size = 0x4, offset = 0x4, fixed_abs, tag = 'smem constant byte address 0x4 - core index']
  #allocation1 [shape = 'u32[72,128]{1,0:T(1,128)}', space=vmem, size = 0x9000, scoped, tag = 'internal scratch']
  #allocation2 [shape = 's32[1]{0}', space=sflag, size = 0x4, scoped, tag = 'scoped memory for quantum_layer_forward.1']
  #allocation3 [shape = 'u8[512]{0}', space=smem, size = 0x200, scoped, tag = 'prefetched SMEM operand 0']
  %s0 = inlined_call_operand.vmem [shape: f32[9], index: 0, kind: input, shape index: {}]
  %s1 = inlined_call_operand.vmem [shape: f32[2,8,128], index: 1, kind: input, shape index: {}]
  %s2 = inlined_call_operand.vmem [shape: f32[8,128], index: 2, kind: output, shape index: {}]
  %s3 = sld [smem:[#allocation0]]
  $region14: #{quantum_layer_forward.1} parent=0
    _
  %s5 = ssub.s32 1, %s3
  %s6 = scalar_select 0, %s5, %s3
  %s8 = sshll.u32 %s0, 4
  %s9 = int_to_ptr.vmem [resolvable:$true] %s8
  %11 = dma.vmem_to_smem %s9, 16, [#allocation3], [#allocation2]
  %13 = dma.done [#allocation2], 16
  %14 = sfence
  // Predicated region
  $region2: #{quantum_layer_forward.1} parent=0 // pred_check
    _
  $region3: #{quantum_layer_forward.1} parent=0 // pred_check_branch
    %16 = sbr.rel (0) target = $region5
  $region4: #{quantum_layer_forward.1} parent=0 // pred_region
    _
  $region5: #{quantum_layer_forward.1} parent=0 // pred_fallthru
    _
  %v17 = vld [vmem:[%s1] sm:$0xff]
  %s18 = scalar_lea.vmem %s1, 8
  %v19 = vld [vmem:[%s18] sm:$0xff]
  %v20 = vand.u32 2147483647, %v17
  %vm21 = vcmp.le.f32.partialorder %v20, 0.7853982
  %vm22 = vcmp.lt.s32.totalorder %v17, 0
  %v23 = vand.u32 %v17, 2139095040
  %v24 = vshrl.u32 %v23, 23
  %v25 = vsub.s32 %v24, 127
  %v26 = vand.u32 2147483647, %v17
  %v27 = vand.u32 %v26, 8388607
  %v28 = vor.u32 %v27, 8388608
  %v29 = vsub.s32 0, %v28
  %v30 = vadd.s32 %v25, 1
  %vm31 = vcmp.gt.s32.totalorder %v30, 0
  %v32 = vsel %vm31, %v30, 0
  %v33 = vshrl.u32 %v32, 5
  %v34 = vand.u32 %v32, 31
  %v35 = vsub.s32 32, %v34
  %v36 = vshrl.u32 683565275, %v35
  %v37 = vshll.u32 683565275, %v34
  %v38 = vshrl.u32 2475754826, %v35
  %v39 = vor.u32 %v37, %v38
  %v40 = vshll.u32 2475754826, %v34
  %v41 = vshrl.u32 2131351028, %v35
  %v42 = vor.u32 %v40, %v41
  %v43 = vshll.u32 2131351028, %v34
  %v44 = vshrl.u32 2102212464, %v35
  %v45 = vor.u32 %v43, %v44
  %v46 = vshll.u32 2102212464, %v34
  %v47 = vshrl.u32 920167782, %v35
  %v48 = vor.u32 %v46, %v47
  %v49 = vshll.u32 920167782, %v34
  %v50 = vshrl.u32 1326507024, %v35
  %v51 = vor.u32 %v49, %v50
  %vm52 = vcmp.lt.s32.totalorder %v33, 1
  %vm53 = vcmp.lt.s32.totalorder %v33, 2
  %vm54 = vcmp.lt.s32.totalorder %v33, 3
  %vm55 = vcmp.lt.s32.totalorder %v33, 4
  %v56 = vsel %vm52, %v36, %v39
  %v57 = vsel %vm55, %v45, 2102212464
  %v58 = vsel %vm54, %v42, %v57
  %v59 = vsel %vm53, %v56, %v58
  %v60 = vsel %vm52, %v39, %v42
  %v61 = vsel %vm55, %v48, 920167782
  %v62 = vsel %vm54, %v45, %v61
  %v63 = vsel %vm53, %v60, %v62
  %v64 = vsel %vm52, %v42, %v45
  %v65 = vsel %vm55, %v51, 1326507024
  %v66 = vsel %vm54, %v48, %v65
  %v67 = vsel %vm53, %v64, %v66
  %v68 = vshll.u32 %v28, 8
  %v69 = vand.u32 %v68, 65535
  %v70 = vshrl.u32 %v68, 16
  %v71 = vand.u32 %v67, 65535
  %v72 = vshrl.u32 %v67, 16
  %v73 = vmul.u32 %v69, %v71
  %v74 = vmul.u32 %v69, %v72
  %v75 = vmul.u32 %v70, %v71
  %v76 = vmul.u32 %v70, %v72
  %v77 = vshll.u32 %v74, 16
  %v78 = vshrl.u32 %v74, 16
  %v79 = vshll.u32 %v75, 16
  %v80 = vshrl.u32 %v75, 16
  %vm81 = vc.u32 %v73, %v77
  %v82 = vsel %vm81, 1, 0
  %v83 = vadd.s32 %v73, %v77
  %v84 = vadd.s32 %v76, %v82
  %vm85 = vc.u32 %v83, %v79
  %v86 = vsel %vm85, 1, 0
  %v87 = vadd.s32 %v83, %v79
  %v88 = vadd.s32 %v84, %v86
  %v89 = vadd.s32 %v88, %v78
  %v90 = vadd.s32 %v89, %v80
  %v91 = vand.u32 %v68, 65535
  %v92 = vshrl.u32 %v68, 16
  %v93 = vand.u32 %v63, 65535
  %v94 = vshrl.u32 %v63, 16
  %v95 = vmul.u32 %v91, %v93
  %v96 = vmul.u32 %v91, %v94
  %v97 = vmul.u32 %v92, %v93
  %v98 = vmul.u32 %v92, %v94
  %v99 = vshll.u32 %v96, 16
  %v100 = vshrl.u32 %v96, 16
  %v101 = vshll.u32 %v97, 16
  %v102 = vshrl.u32 %v97, 16
  %vm103 = vc.u32 %v95, %v99
  %v104 = vsel %vm103, 1, 0
  %v105 = vadd.s32 %v95, %v99
  %v106 = vadd.s32 %v98, %v104
  %vm107 = vc.u32 %v105, %v101
  %v108 = vsel %vm107, 1, 0
  %v109 = vadd.s32 %v105, %v101
  %v110 = vadd.s32 %v106, %v108
  %v111 = vadd.s32 %v110, %v100
  %v112 = vadd.s32 %v111, %v102
  %v113 = vmul.u32 %v68, %v59
  %v114 = vadd.s32 %v90, %v109
  %vm115 = vc.u32 %v90, %v109
  %v116 = vadd.s32 %v112, 1
  %v117 = vsel %vm115, %v116, %v112
  %v118 = vadd.s32 %v113, %v117
  %v119 = vadd.s32 %v118, 536870912
  %v120 = vshrl.u32 %v119, 30
  %v121 = vshll.u32 %v120, 30
  %v122 = vsub.s32 %v118, %v121
  %vm123 = vcmp.lt.s32.totalorder %v122, 0
  %v124 = vsub.s32 0, %v122
  %v125 = vsel %vm123, %v124, %v122
  %v126 = vclz %v125
  %v127 = vsub.s32 %v126, 2
  %vm128 = vcmp.gt.s32.totalorder 0, %v127
  %v129 = vsel %vm128, 0, %v127
  %v130 = vsub.s32 32, %v129
  %v131 = vshll.u32 %v122, %v129
  %v132 = vshrl.u32 %v114, %v130
  %v133 = vor.u32 %v131, %v132
  %v134 = vsub.s32 4294967266, %v129
  %v135 = vadd.s32 %v134, 127
  %v136 = vshll.u32 %v135, 23
  %v137 = vor.u32 4788187, %v136
  %v138 = vand.u32 2147483647, %v137
  %v140 = vcvt.s32.f32 %v133
  %v141 = vmul.f32 %v140, %v138
  %v142 = vxor.u32 %v141, 2147483648
  %v143 = vsel %vm22, %v142, %v141
  %v144 = vsub.s32 4, %v120
  %v145 = vsel %vm22, %v144, %v120
  %v146 = vsel %vm21, %v17, %v143
  %v147 = vsel %vm21, 0, %v145
  %v148 = vmul.f32 %v146, %v146
  %v149 = vmul.f32 %v148, -0.001358992
  %v150 = vadd.f32 %v149, 0.041655596
  %v151 = vmul.f32 %v148, %v150
  %v152 = vadd.f32 %v151, -0.4999988
  %v153 = vmul.f32 %v148, %v152
  %v154 = vadd.f32 1.0, %v153
  %v155 = vmul.f32 %v146, %v146
  %v156 = vmul.f32 %v155, -0.00019511016
  %v157 = vadd.f32 %v156, 0.008332121
  %v158 = vmul.f32 %v155, %v157
  %v159 = vadd.f32 %v158, -0.16666654
  %v160 = vmul.f32 %v155, %v159
  %v161 = vadd.f32 %v160, 1.0
  %v162 = vmul.f32 %v161, %v146
  %vm163 = vweird.f32 %v17
  %v164 = vadd.s32 %v147, 3
  %v165 = vand.u32 %v164, 3
  %vm166 = vcmp.lt.s32.totalorder %v165, 2
  %vm167 = vcmp.eq.s32.totalorder %v165, 0
  %v168 = vxor.u32 %v162, 2147483648
  %v169 = vsel %vm167, %v154, %v168
  %vm170 = vcmp.eq.s32.totalorder %v165, 2
  %v171 = vxor.u32 %v154, 2147483648
  %v172 = vsel %vm170, %v171, %v162
  %v173 = vsel %vm166, %v169, %v172
  %v174 = vsel %vm163, nan, %v173
  %v175 = vand.u32 2147483647, %v17
  %vm176 = vcmp.le.f32.partialorder %v175, 0.7853982
  %vm177 = vcmp.lt.s32.totalorder %v17, 0
  %v178 = vand.u32 %v17, 2139095040
  %v179 = vshrl.u32 %v178, 23
  %v180 = vsub.s32 %v179, 127
  %v181 = vand.u32 2147483647, %v17
  %v182 = vand.u32 %v181, 8388607
  %v183 = vor.u32 %v182, 8388608
  %v184 = vsub.s32 0, %v183
  %v185 = vadd.s32 %v180, 1
  %vm186 = vcmp.gt.s32.totalorder %v185, 0
  %v187 = vsel %vm186, %v185, 0
  %v188 = vshrl.u32 %v187, 5
  %v189 = vand.u32 %v187, 31
  %v190 = vsub.s32 32, %v189
  %v191 = vshrl.u32 683565275, %v190
  %v192 = vshll.u32 683565275, %v189
  %v193 = vshrl.u32 2475754826, %v190
  %v194 = vor.u32 %v192, %v193
  %v195 = vshll.u32 2475754826, %v189
  %v196 = vshrl.u32 2131351028, %v190
  %v197 = vor.u32 %v195, %v196
  %v198 = vshll.u32 2131351028, %v189
  %v199 = vshrl.u32 2102212464, %v190
  %v200 = vor.u32 %v198, %v199
  %v201 = vshll.u32 2102212464, %v189
  %v202 = vshrl.u32 920167782, %v190
  %v203 = vor.u32 %v201, %v202
  %v204 = vshll.u32 920167782, %v189
  %v205 = vshrl.u32 1326507024, %v190
  %v206 = vor.u32 %v204, %v205
  %vm207 = vcmp.lt.s32.totalorder %v188, 1
  %vm208 = vcmp.lt.s32.totalorder %v188, 2
  %vm209 = vcmp.lt.s32.totalorder %v188, 3
  %vm210 = vcmp.lt.s32.totalorder %v188, 4
  %v211 = vsel %vm207, %v191, %v194
  %v212 = vsel %vm210, %v200, 2102212464
  %v213 = vsel %vm209, %v197, %v212
  %v214 = vsel %vm208, %v211, %v213
  %v215 = vsel %vm207, %v194, %v197
  %v216 = vsel %vm210, %v203, 920167782
  %v217 = vsel %vm209, %v200, %v216
  %v218 = vsel %vm208, %v215, %v217
  %v219 = vsel %vm207, %v197, %v200
  %v220 = vsel %vm210, %v206, 1326507024
  %v221 = vsel %vm209, %v203, %v220
  %v222 = vsel %vm208, %v219, %v221
  %v223 = vshll.u32 %v183, 8
  %v224 = vand.u32 %v223, 65535
  %v225 = vshrl.u32 %v223, 16
  %v226 = vand.u32 %v222, 65535
  %v227 = vshrl.u32 %v222, 16
  %v228 = vmul.u32 %v224, %v226
  %v229 = vmul.u32 %v224, %v227
  %v230 = vmul.u32 %v225, %v226
  %v231 = vmul.u32 %v225, %v227
  %v232 = vshll.u32 %v229, 16
  %v233 = vshrl.u32 %v229, 16
  %v234 = vshll.u32 %v230, 16
  %v235 = vshrl.u32 %v230, 16
  %vm236 = vc.u32 %v228, %v232
  %v237 = vsel %vm236, 1, 0
  %v238 = vadd.s32 %v228, %v232
  %v239 = vadd.s32 %v231, %v237
  %vm240 = vc.u32 %v238, %v234
  %v241 = vsel %vm240, 1, 0
  %v242 = vadd.s32 %v238, %v234
  %v243 = vadd.s32 %v239, %v241
  %v244 = vadd.s32 %v243, %v233
  %v245 = vadd.s32 %v244, %v235
  %v246 = vand.u32 %v223, 65535
  %v247 = vshrl.u32 %v223, 16
  %v248 = vand.u32 %v218, 65535
  %v249 = vshrl.u32 %v218, 16
  %v250 = vmul.u32 %v246, %v248
  %v251 = vmul.u32 %v246, %v249
  %v252 = vmul.u32 %v247, %v248
  %v253 = vmul.u32 %v247, %v249
  %v254 = vshll.u32 %v251, 16
  %v255 = vshrl.u32 %v251, 16
  %v256 = vshll.u32 %v252, 16
  %v257 = vshrl.u32 %v252, 16
  %vm258 = vc.u32 %v250, %v254
  %v259 = vsel %vm258, 1, 0
  %v260 = vadd.s32 %v250, %v254
  %v261 = vadd.s32 %v253, %v259
  %vm262 = vc.u32 %v260, %v256
  %v263 = vsel %vm262, 1, 0
  %v264 = vadd.s32 %v260, %v256
  %v265 = vadd.s32 %v261, %v263
  %v266 = vadd.s32 %v265, %v255
  %v267 = vadd.s32 %v266, %v257
  %v268 = vmul.u32 %v223, %v214
  %v269 = vadd.s32 %v245, %v264
  %vm270 = vc.u32 %v245, %v264
  %v271 = vadd.s32 %v267, 1
  %v272 = vsel %vm270, %v271, %v267
  %v273 = vadd.s32 %v268, %v272
  %v274 = vadd.s32 %v273, 536870912
  %v275 = vshrl.u32 %v274, 30
  %v276 = vshll.u32 %v275, 30
  %v277 = vsub.s32 %v273, %v276
  %vm278 = vcmp.lt.s32.totalorder %v277, 0
  %v279 = vsub.s32 0, %v277
  %v280 = vsel %vm278, %v279, %v277
  %v281 = vclz %v280
  %v282 = vsub.s32 %v281, 2
  %vm283 = vcmp.gt.s32.totalorder 0, %v282
  %v284 = vsel %vm283, 0, %v282
  %v285 = vsub.s32 32, %v284
  %v286 = vshll.u32 %v277, %v284
  %v287 = vshrl.u32 %v269, %v285
  %v288 = vor.u32 %v286, %v287
  %v289 = vsub.s32 4294967266, %v284
  %v290 = vadd.s32 %v289, 127
  %v291 = vshll.u32 %v290, 23
  %v292 = vor.u32 4788187, %v291
  %v293 = vand.u32 2147483647, %v292
  %v295 = vcvt.s32.f32 %v288
  %v296 = vmul.f32 %v295, %v293
  %v297 = vxor.u32 %v296, 2147483648
  %v298 = vsel %vm177, %v297, %v296
  %v299 = vsub.s32 4, %v275
  %v300 = vsel %vm177, %v299, %v275
  %v301 = vsel %vm176, %v17, %v298
  %v302 = vsel %vm176, 0, %v300
  %v303 = vmul.f32 %v301, %v301
  %v304 = vmul.f32 %v303, -0.001358992
  %v305 = vadd.f32 %v304, 0.041655596
  %v306 = vmul.f32 %v303, %v305
  %v307 = vadd.f32 %v306, -0.4999988
  %v308 = vmul.f32 %v303, %v307
  %v309 = vadd.f32 1.0, %v308
  %v310 = vmul.f32 %v301, %v301
  %v311 = vmul.f32 %v310, -0.00019511016
  %v312 = vadd.f32 %v311, 0.008332121
  %v313 = vmul.f32 %v310, %v312
  %v314 = vadd.f32 %v313, -0.16666654
  %v315 = vmul.f32 %v310, %v314
  %v316 = vadd.f32 %v315, 1.0
  %v317 = vmul.f32 %v316, %v301
  %vm318 = vweird.f32 %v17
  %v319 = vand.u32 %v302, 3
  %vm320 = vcmp.lt.s32.totalorder %v319, 2
  %vm321 = vcmp.eq.s32.totalorder %v319, 0
  %v322 = vxor.u32 %v317, 2147483648
  %v323 = vsel %vm321, %v309, %v322
  %vm324 = vcmp.eq.s32.totalorder %v319, 2
  %v325 = vxor.u32 %v309, 2147483648
  %v326 = vsel %vm324, %v325, %v317
  %v327 = vsel %vm320, %v323, %v326
  %v328 = vsel %vm318, nan, %v327
  %v329 = vand.u32 2147483647, %v19
  %vm330 = vcmp.le.f32.partialorder %v329, 0.7853982
  %vm331 = vcmp.lt.s32.totalorder %v19, 0
  %v332 = vand.u32 %v19, 2139095040
  %v333 = vshrl.u32 %v332, 23
  %v334 = vsub.s32 %v333, 127
  %v335 = vand.u32 2147483647, %v19
  %v336 = vand.u32 %v335, 8388607
  %v337 = vor.u32 %v336, 8388608
  %v338 = vsub.s32 0, %v337
  %v339 = vadd.s32 %v334, 1
  %vm340 = vcmp.gt.s32.totalorder %v339, 0
  %v341 = vsel %vm340, %v339, 0
  %v342 = vshrl.u32 %v341, 5
  %v343 = vand.u32 %v341, 31
  %v344 = vsub.s32 32, %v343
  %v345 = vshrl.u32 683565275, %v344
  %v346 = vshll.u32 683565275, %v343
  %v347 = vshrl.u32 2475754826, %v344
  %v348 = vor.u32 %v346, %v347
  %v349 = vshll.u32 2475754826, %v343
  %v350 = vshrl.u32 2131351028, %v344
  %v351 = vor.u32 %v349, %v350
  %v352 = vshll.u32 2131351028, %v343
  %v353 = vshrl.u32 2102212464, %v344
  %v354 = vor.u32 %v352, %v353
  %v355 = vshll.u32 2102212464, %v343
  %v356 = vshrl.u32 920167782, %v344
  %v357 = vor.u32 %v355, %v356
  %v358 = vshll.u32 920167782, %v343
  %v359 = vshrl.u32 1326507024, %v344
  %v360 = vor.u32 %v358, %v359
  %vm361 = vcmp.lt.s32.totalorder %v342, 1
  %vm362 = vcmp.lt.s32.totalorder %v342, 2
  %vm363 = vcmp.lt.s32.totalorder %v342, 3
  %vm364 = vcmp.lt.s32.totalorder %v342, 4
  %v365 = vsel %vm361, %v345, %v348
  %v366 = vsel %vm364, %v354, 2102212464
  %v367 = vsel %vm363, %v351, %v366
  %v368 = vsel %vm362, %v365, %v367
  %v369 = vsel %vm361, %v348, %v351
  %v370 = vsel %vm364, %v357, 920167782
  %v371 = vsel %vm363, %v354, %v370
  %v372 = vsel %vm362, %v369, %v371
  %v373 = vsel %vm361, %v351, %v354
  %v374 = vsel %vm364, %v360, 1326507024
  %v375 = vsel %vm363, %v357, %v374
  %v376 = vsel %vm362, %v373, %v375
  %v377 = vshll.u32 %v337, 8
  %v378 = vand.u32 %v377, 65535
  %v379 = vshrl.u32 %v377, 16
  %v380 = vand.u32 %v376, 65535
  %v381 = vshrl.u32 %v376, 16
  %v382 = vmul.u32 %v378, %v380
  %v383 = vmul.u32 %v378, %v381
  %v384 = vmul.u32 %v379, %v380
  %v385 = vmul.u32 %v379, %v381
  %v386 = vshll.u32 %v383, 16
  %v387 = vshrl.u32 %v383, 16
  %v388 = vshll.u32 %v384, 16
  %v389 = vshrl.u32 %v384, 16
  %vm390 = vc.u32 %v382, %v386
  %v391 = vsel %vm390, 1, 0
  %v392 = vadd.s32 %v382, %v386
  %v393 = vadd.s32 %v385, %v391
  %vm394 = vc.u32 %v392, %v388
  %v395 = vsel %vm394, 1, 0
  %v396 = vadd.s32 %v392, %v388
  %v397 = vadd.s32 %v393, %v395
  %v398 = vadd.s32 %v397, %v387
  %v399 = vadd.s32 %v398, %v389
  %v400 = vand.u32 %v377, 65535
  %v401 = vshrl.u32 %v377, 16
  %v402 = vand.u32 %v372, 65535
  %v403 = vshrl.u32 %v372, 16
  %v404 = vmul.u32 %v400, %v402
  %v405 = vmul.u32 %v400, %v403
  %v406 = vmul.u32 %v401, %v402
  %v407 = vmul.u32 %v401, %v403
  %v408 = vshll.u32 %v405, 16
  %v409 = vshrl.u32 %v405, 16
  %v410 = vshll.u32 %v406, 16
  %v411 = vshrl.u32 %v406, 16
  %vm412 = vc.u32 %v404, %v408
  %v413 = vsel %vm412, 1, 0
  %v414 = vadd.s32 %v404, %v408
  %v415 = vadd.s32 %v407, %v413
  %vm416 = vc.u32 %v414, %v410
  %v417 = vsel %vm416, 1, 0
  %v418 = vadd.s32 %v414, %v410
  %v419 = vadd.s32 %v415, %v417
  %v420 = vadd.s32 %v419, %v409
  %v421 = vadd.s32 %v420, %v411
  %v422 = vmul.u32 %v377, %v368
  %v423 = vadd.s32 %v399, %v418
  %vm424 = vc.u32 %v399, %v418
  %v425 = vadd.s32 %v421, 1
  %v426 = vsel %vm424, %v425, %v421
  %v427 = vadd.s32 %v422, %v426
  %v428 = vadd.s32 %v427, 536870912
  %v429 = vshrl.u32 %v428, 30
  %v430 = vshll.u32 %v429, 30
  %v431 = vsub.s32 %v427, %v430
  %vm432 = vcmp.lt.s32.totalorder %v431, 0
  %v433 = vsub.s32 0, %v431
  %v434 = vsel %vm432, %v433, %v431
  %v435 = vclz %v434
  %v436 = vsub.s32 %v435, 2
  %vm437 = vcmp.gt.s32.totalorder 0, %v436
  %v438 = vsel %vm437, 0, %v436
  %v439 = vsub.s32 32, %v438
  %v440 = vshll.u32 %v431, %v438
  %v441 = vshrl.u32 %v423, %v439
  %v442 = vor.u32 %v440, %v441
  %v443 = vsub.s32 4294967266, %v438
  %v444 = vadd.s32 %v443, 127
  %v445 = vshll.u32 %v444, 23
  %v446 = vor.u32 4788187, %v445
  %v447 = vand.u32 2147483647, %v446
  %v449 = vcvt.s32.f32 %v442
  %v450 = vmul.f32 %v449, %v447
  %v451 = vxor.u32 %v450, 2147483648
  %v452 = vsel %vm331, %v451, %v450
  %v453 = vsub.s32 4, %v429
  %v454 = vsel %vm331, %v453, %v429
  %v455 = vsel %vm330, %v19, %v452
  %v456 = vsel %vm330, 0, %v454
  %v457 = vmul.f32 %v455, %v455
  %v458 = vmul.f32 %v457, -0.001358992
  %v459 = vadd.f32 %v458, 0.041655596
  %v460 = vmul.f32 %v457, %v459
  %v461 = vadd.f32 %v460, -0.4999988
  %v462 = vmul.f32 %v457, %v461
  %v463 = vadd.f32 1.0, %v462
  %v464 = vmul.f32 %v455, %v455
  %v465 = vmul.f32 %v464, -0.00019511016
  %v466 = vadd.f32 %v465, 0.008332121
  %v467 = vmul.f32 %v464, %v466
  %v468 = vadd.f32 %v467, -0.16666654
  %v469 = vmul.f32 %v464, %v468
  %v470 = vadd.f32 %v469, 1.0
  %v471 = vmul.f32 %v470, %v455
  %vm472 = vweird.f32 %v19
  %v473 = vadd.s32 %v456, 3
  %v474 = vand.u32 %v473, 3
  %vm475 = vcmp.lt.s32.totalorder %v474, 2
  %vm476 = vcmp.eq.s32.totalorder %v474, 0
  %v477 = vxor.u32 %v471, 2147483648
  %v478 = vsel %vm476, %v463, %v477
  %vm479 = vcmp.eq.s32.totalorder %v474, 2
  %v480 = vxor.u32 %v463, 2147483648
  %v481 = vsel %vm479, %v480, %v471
  %v482 = vsel %vm475, %v478, %v481
  %v483 = vsel %vm472, nan, %v482
  %v484 = vand.u32 2147483647, %v19
  %vm485 = vcmp.le.f32.partialorder %v484, 0.7853982
  %vm486 = vcmp.lt.s32.totalorder %v19, 0
  %v487 = vand.u32 %v19, 2139095040
  %v488 = vshrl.u32 %v487, 23
  %v489 = vsub.s32 %v488, 127
  %v490 = vand.u32 2147483647, %v19
  %v491 = vand.u32 %v490, 8388607
  %v492 = vor.u32 %v491, 8388608
  %v493 = vsub.s32 0, %v492
  %v494 = vadd.s32 %v489, 1
  %vm495 = vcmp.gt.s32.totalorder %v494, 0
  %v496 = vsel %vm495, %v494, 0
  %v497 = vshrl.u32 %v496, 5
  %v498 = vand.u32 %v496, 31
  %v499 = vsub.s32 32, %v498
  %v500 = vshrl.u32 683565275, %v499
  %v501 = vshll.u32 683565275, %v498
  %v502 = vshrl.u32 2475754826, %v499
  %v503 = vor.u32 %v501, %v502
  %v504 = vshll.u32 2475754826, %v498
  %v505 = vshrl.u32 2131351028, %v499
  %v506 = vor.u32 %v504, %v505
  %v507 = vshll.u32 2131351028, %v498
  %v508 = vshrl.u32 2102212464, %v499
  %v509 = vor.u32 %v507, %v508
  %v510 = vshll.u32 2102212464, %v498
  %v511 = vshrl.u32 920167782, %v499
  %v512 = vor.u32 %v510, %v511
  %v513 = vshll.u32 920167782, %v498
  %v514 = vshrl.u32 1326507024, %v499
  %v515 = vor.u32 %v513, %v514
  %vm516 = vcmp.lt.s32.totalorder %v497, 1
  %vm517 = vcmp.lt.s32.totalorder %v497, 2
  %vm518 = vcmp.lt.s32.totalorder %v497, 3
  %vm519 = vcmp.lt.s32.totalorder %v497, 4
  %v520 = vsel %vm516, %v500, %v503
  %v521 = vsel %vm519, %v509, 2102212464
  %v522 = vsel %vm518, %v506, %v521
  %v523 = vsel %vm517, %v520, %v522
  %v524 = vsel %vm516, %v503, %v506
  %v525 = vsel %vm519, %v512, 920167782
  %v526 = vsel %vm518, %v509, %v525
  %v527 = vsel %vm517, %v524, %v526
  %v528 = vsel %vm516, %v506, %v509
  %v529 = vsel %vm519, %v515, 1326507024
  %v530 = vsel %vm518, %v512, %v529
  %v531 = vsel %vm517, %v528, %v530
  %v532 = vshll.u32 %v492, 8
  %v533 = vand.u32 %v532, 65535
  %v534 = vshrl.u32 %v532, 16
  %v535 = vand.u32 %v531, 65535
  %v536 = vshrl.u32 %v531, 16
  %v537 = vmul.u32 %v533, %v535
  %v538 = vmul.u32 %v533, %v536
  %v539 = vmul.u32 %v534, %v535
  %v540 = vmul.u32 %v534, %v536
  %v541 = vshll.u32 %v538, 16
  %v542 = vshrl.u32 %v538, 16
  %v543 = vshll.u32 %v539, 16
  %v544 = vshrl.u32 %v539, 16
  %vm545 = vc.u32 %v537, %v541
  %v546 = vsel %vm545, 1, 0
  %v547 = vadd.s32 %v537, %v541
  %v548 = vadd.s32 %v540, %v546
  %vm549 = vc.u32 %v547, %v543
  %v550 = vsel %vm549, 1, 0
  %v551 = vadd.s32 %v547, %v543
  %v552 = vadd.s32 %v548, %v550
  %v553 = vadd.s32 %v552, %v542
  %v554 = vadd.s32 %v553, %v544
  %v555 = vand.u32 %v532, 65535
  %v556 = vshrl.u32 %v532, 16
  %v557 = vand.u32 %v527, 65535
  %v558 = vshrl.u32 %v527, 16
  %v559 = vmul.u32 %v555, %v557
  %v560 = vmul.u32 %v555, %v558
  %v561 = vmul.u32 %v556, %v557
  %v562 = vmul.u32 %v556, %v558
  %v563 = vshll.u32 %v560, 16
  %v564 = vshrl.u32 %v560, 16
  %v565 = vshll.u32 %v561, 16
  %v566 = vshrl.u32 %v561, 16
  %vm567 = vc.u32 %v559, %v563
  %v568 = vsel %vm567, 1, 0
  %v569 = vadd.s32 %v559, %v563
  %v570 = vadd.s32 %v562, %v568
  %vm571 = vc.u32 %v569, %v565
  %v572 = vsel %vm571, 1, 0
  %v573 = vadd.s32 %v569, %v565
  %v574 = vadd.s32 %v570, %v572
  %v575 = vadd.s32 %v574, %v564
  %v576 = vadd.s32 %v575, %v566
  %v577 = vmul.u32 %v532, %v523
  %v578 = vadd.s32 %v554, %v573
  %vm579 = vc.u32 %v554, %v573
  %v580 = vadd.s32 %v576, 1
  %v581 = vsel %vm579, %v580, %v576
  %v582 = vadd.s32 %v577, %v581
  %v583 = vadd.s32 %v582, 536870912
  %v584 = vshrl.u32 %v583, 30
  %v585 = vshll.u32 %v584, 30
  %v586 = vsub.s32 %v582, %v585
  %vm587 = vcmp.lt.s32.totalorder %v586, 0
  %v588 = vsub.s32 0, %v586
  %v589 = vsel %vm587, %v588, %v586
  %v590 = vclz %v589
  %v591 = vsub.s32 %v590, 2
  %vm592 = vcmp.gt.s32.totalorder 0, %v591
  %v593 = vsel %vm592, 0, %v591
  %v594 = vsub.s32 32, %v593
  %v595 = vshll.u32 %v586, %v593
  %v596 = vshrl.u32 %v578, %v594
  %v597 = vor.u32 %v595, %v596
  %v598 = vsub.s32 4294967266, %v593
  %v599 = vadd.s32 %v598, 127
  %v600 = vshll.u32 %v599, 23
  %v601 = vor.u32 4788187, %v600
  %v602 = vand.u32 2147483647, %v601
  %v604 = vcvt.s32.f32 %v597
  %v605 = vmul.f32 %v604, %v602
  %v606 = vxor.u32 %v605, 2147483648
  %v607 = vsel %vm486, %v606, %v605
  %v608 = vsub.s32 4, %v584
  %v609 = vsel %vm486, %v608, %v584
  %v610 = vsel %vm485, %v19, %v607
  %v611 = vsel %vm485, 0, %v609
  %v612 = vmul.f32 %v610, %v610
  %v613 = vmul.f32 %v612, -0.001358992
  %v614 = vadd.f32 %v613, 0.041655596
  %v615 = vmul.f32 %v612, %v614
  %v616 = vadd.f32 %v615, -0.4999988
  %v617 = vmul.f32 %v612, %v616
  %v618 = vadd.f32 1.0, %v617
  %v619 = vmul.f32 %v610, %v610
  %v620 = vmul.f32 %v619, -0.00019511016
  %v621 = vadd.f32 %v620, 0.008332121
  %v622 = vmul.f32 %v619, %v621
  %v623 = vadd.f32 %v622, -0.16666654
  %v624 = vmul.f32 %v619, %v623
  %v625 = vadd.f32 %v624, 1.0
  %v626 = vmul.f32 %v625, %v610
  %vm627 = vweird.f32 %v19
  %v628 = vand.u32 %v611, 3
  %vm629 = vcmp.lt.s32.totalorder %v628, 2
  %vm630 = vcmp.eq.s32.totalorder %v628, 0
  %v631 = vxor.u32 %v626, 2147483648
  %v632 = vsel %vm630, %v618, %v631
  %vm633 = vcmp.eq.s32.totalorder %v628, 2
  %v634 = vxor.u32 %v618, 2147483648
  %v635 = vsel %vm633, %v634, %v626
  %v636 = vsel %vm629, %v632, %v635
  %v637 = vsel %vm627, nan, %v636
  %s638 = sld [smem:[#allocation3]]
  %s639 = sld [smem:[#allocation3 + $0x1]]
  %v640 = vstv %s639
  %v641 = vmul.f32 %v640, %v483
  %v642 = vstv %s638
  %v643 = vadd.f32 %v642, %v641
  %s644 = sld [smem:[#allocation3 + $0x2]]
  %v645 = vstv %s644
  %v646 = vmul.f32 %v645, %v637
  %v647 = vadd.f32 %v643, %v646
  %s648 = sld [smem:[#allocation3 + $0x3]]
  %v649 = vstv %s648
  %v650 = vmul.f32 %v649, %v174
  %v651 = vadd.f32 %v647, %v650
  %s652 = sld [smem:[#allocation3 + $0x4]]
  %v653 = vmul.f32 %v174, %v483
  %v654 = vstv %s652
  %v655 = vmul.f32 %v654, %v653
  %v656 = vadd.f32 %v651, %v655
  %s657 = sld [smem:[#allocation3 + $0x5]]
  %v658 = vmul.f32 %v174, %v637
  %v659 = vstv %s657
  %v660 = vmul.f32 %v659, %v658
  %v661 = vadd.f32 %v656, %v660
  %s662 = sld [smem:[#allocation3 + $0x6]]
  %v663 = vstv %s662
  %v664 = vmul.f32 %v663, %v328
  %v665 = vadd.f32 %v661, %v664
  %s666 = sld [smem:[#allocation3 + $0x7]]
  %v667 = vmul.f32 %v328, %v483
  %v668 = vstv %s666
  %v669 = vmul.f32 %v668, %v667
  %v670 = vadd.f32 %v665, %v669
  %s671 = sld [smem:[#allocation3 + $0x8]]
  %v672 = vmul.f32 %v328, %v637
  %v673 = vstv %s671
  %v674 = vmul.f32 %v673, %v672
  %v675 = vadd.f32 %v670, %v674
  %676 = vst [vmem:[%s2] sm:$0xff] %v675
  // Predicated region
  $region6: #{quantum_layer_forward.1} parent=0 // pred_check
    _
  $region7: #{quantum_layer_forward.1} parent=0 // pred_check_branch
    %678 = sbr.rel (0) target = $region9
  $region8: #{quantum_layer_forward.1} parent=0 // pred_region
    _
  $region9: #{quantum_layer_forward.1} parent=0 // pred_fallthru
    _
  // Predicated region
  $region10: #{quantum_layer_forward.1} parent=0 // pred_check
    _
  $region11: #{quantum_layer_forward.1} parent=0 // pred_check_branch
    %680 = sbr.rel (0) target = $region13
  $region12: #{quantum_layer_forward.1} parent=0 // pred_region
    _
  $region13: #{quantum_layer_forward.1} parent=0 // pred_fallthru
    _

</llo_original>
